<compile_context>
chip_gen: v7x
topology: tpu7x:2x2x1
jax: 0.10.0
libtpu: 0.0.40
codegen_flags: <defaults>
</compile_context>

<pallas_src>
import jax
import jax.numpy as jnp
from jax.experimental import pallas as pl
from jax.experimental.pallas import tpu as pltpu

_MIB = 1024 * 1024


def _round_up(a, b):
    return ((a + b - 1) // b) * b


def _cdiv(a, b):
    return -(-a // b)


def _vmem_capacity_bytes():
    # Physical VMEM: 128 MiB on v5e/v6e, 64 MiB per TensorCore on v7x.
    try:
        cap = int(pltpu.get_tpu_info().vmem_capacity_bytes)
    except Exception:
        cap = 64 * _MIB  # conservative (v7x)
    return max(cap, 32 * _MIB)


# ----------------------------------------------------------------------------------
# Path A: resident-weight / full-K schedule (no reduction grid axis, no accumulator).
# ----------------------------------------------------------------------------------
def _fullk_kernel(x_ref, w_ref, b_ref, o_ref):
    xv = x_ref[...]
    if xv.dtype != w_ref.dtype:
        # x is streamed from HBM exactly once in this schedule, so it arrives in its
        # native dtype and the cheap VPU downcast happens here (saves a wrapper pass).
        xv = xv.astype(w_ref.dtype)
    acc = jnp.dot(xv, w_ref[...], preferred_element_type=jnp.float32)
    o_ref[...] = (acc + b_ref[...]).astype(o_ref.dtype)


def _conv1d_fullk(x2, w2, b2, out_dtype, *, w_budget, vmem_cap, tm_max=512):
    """x2: (m, k_pad) any float dtype, w2: (k_pad, nf) compute dtype, b2: (1, nf) f32."""
    m, k_pad = x2.shape
    nf = w2.shape[1]
    c_item = jnp.dtype(w2.dtype).itemsize
    out_item = jnp.dtype(out_dtype).itemsize

    # Widest lane-aligned weight slab that fits the VMEM budget (counted double-buffered).
    n_pad_min = _round_up(nf, 128)
    n_tiles, tn = 1, n_pad_min
    while k_pad * tn * c_item > w_budget:
        if tn <= 128:
            return None  # weight too wide even at 128 lanes -> use the K-tiled fallback
        n_tiles *= 2
        tn = _round_up(_cdiv(n_pad_min, n_tiles), 128)
    n_pad = tn * n_tiles

    # N padding (usually a no-op: GPT-2 widths are multiples of 128) -> lane-dense stores.
    if n_pad != nf:
        w2 = jnp.pad(w2, ((0, 0), (0, n_pad - nf)))
        b2 = jnp.pad(b2, ((0, 0), (0, n_pad - nf)))

    # If x is re-read (n_tiles > 1), pre-cast once so every re-read moves 2 B/elem;
    # otherwise keep native dtype and cast per tile inside the kernel.
    if n_tiles > 1 and x2.dtype != w2.dtype:
        x2 = x2.astype(w2.dtype)
    x_item = jnp.dtype(x2.dtype).itemsize

    # M tile: big (amortize per-step overhead), 16-row aligned (bf16 sublane packing),
    # clamped to the VMEM budget. No M padding: Pallas masks the partial last block and
    # out-of-bounds M reads only feed rows that are never kept.
    tm = min(tm_max, _round_up(m, 16))
    if _cdiv(m, tm) == 1 and n_tiles == 1 and m >= 256:
        # keep >= 2 parallel blocks so v7x's second TensorCore gets work
        tm = _round_up(_cdiv(m, 2), 16)

    def vmem_need(tm_):
        return (k_pad * tn * c_item * 2      # resident weight slab (double-buffered)
                + tm_ * k_pad * x_item * 2   # activation tile
                + tm_ * tn * out_item * 2    # output tile
                + tn * 4 * 2)                # bias row
    while vmem_need(tm) > int(vmem_cap * 0.8) and tm > 16:
        tm = max(16, _round_up(tm // 2, 16))

    m_tiles = _cdiv(m, tm)
    grid = (n_tiles, m_tiles)  # N outer -> each weight slab is DMA'd from HBM once

    cost = pl.CostEstimate(
        flops=2 * m * k_pad * n_pad,
        transcendentals=0,
        bytes_accessed=(x2.size * x_item * n_tiles   # x re-read once per N slab
                        + w2.size * c_item           # weight read once
                        + b2.size * 4
                        + m * n_pad * out_item),
    )
    vmem_limit = int(min(vmem_cap * 0.9, max(32 * _MIB, vmem_need(tm) + 4 * _MIB)))

    return pl.pallas_call(
        _fullk_kernel,
        out_shape=jax.ShapeDtypeStruct((m, n_pad), out_dtype),
        grid_spec=pltpu.PrefetchScalarGridSpec(
            num_scalar_prefetch=0,
            grid=grid,
            in_specs=[
                pl.BlockSpec((tm, k_pad), lambda j, i: (i, 0)),   # activation tile
                pl.BlockSpec((k_pad, tn), lambda j, i: (0, j)),   # resident weight slab
                pl.BlockSpec((1, tn), lambda j, i: (0, j)),       # bias row (lane-aligned)
            ],
            out_specs=pl.BlockSpec((tm, tn), lambda j, i: (i, j)),
        ),
        compiler_params=pltpu.CompilerParams(
            dimension_semantics=("parallel", "parallel"),
            vmem_limit_bytes=vmem_limit,
        ),
        cost_estimate=cost,
    )(x2, w2, b2)


# ----------------------------------------------------------------------------------
# Path B: K-tiled fallback (very wide reductions) with f32 accumulator scratch.
# ----------------------------------------------------------------------------------
def _ktiled_kernel(x_ref, w_ref, b_ref, o_ref, acc_ref):
    k = pl.program_id(2)

    @pl.when(k == 0)
    def _():
        acc_ref[...] = jnp.zeros_like(acc_ref)

    acc_ref[...] += jnp.dot(x_ref[...], w_ref[...], preferred_element_type=jnp.float32)

    @pl.when(k == pl.num_programs(2) - 1)
    def _():
        o_ref[...] = (acc_ref[...] + b_ref[...]).astype(o_ref.dtype)


def _conv1d_ktiled(x2, w2, b2, out_dtype, *, tm=512, tn=512, tk=512):
    """x2: (m, k0) compute dtype, w2: (k0, nf) compute dtype, b2: (1, nf) f32."""
    m, k0 = x2.shape
    nf = w2.shape[1]

    tm = min(tm, _round_up(m, 16))
    tk = min(tk, _round_up(k0, 128))
    tn = min(tn, _round_up(nf, 128))

    # K padding is mandatory for correctness (OOB K reads would contaminate valid rows);
    # N padding keeps stores lane-dense. M is never padded.
    k_pad = _round_up(k0, tk)
    n_pad = _round_up(nf, tn)
    if k_pad != k0:
        x2 = jnp.pad(x2, ((0, 0), (0, k_pad - k0)))
    if (k_pad, n_pad) != w2.shape:
        w2 = jnp.pad(w2, ((0, k_pad - k0), (0, n_pad - nf)))
    if n_pad != nf:
        b2 = jnp.pad(b2, ((0, 0), (0, n_pad - nf)))

    grid = (_cdiv(m, tm), n_pad // tn, k_pad // tk)

    cost = pl.CostEstimate(
        flops=2 * m * k_pad * n_pad,
        transcendentals=0,
        bytes_accessed=(x2.size * jnp.dtype(x2.dtype).itemsize * grid[1]
                        + w2.size * jnp.dtype(w2.dtype).itemsize * grid[0]
                        + b2.size * 4
                        + m * n_pad * jnp.dtype(out_dtype).itemsize),
    )

    return pl.pallas_call(
        _ktiled_kernel,
        out_shape=jax.ShapeDtypeStruct((m, n_pad), out_dtype),
        grid_spec=pltpu.PrefetchScalarGridSpec(
            num_scalar_prefetch=0,
            grid=grid,
            in_specs=[
                pl.BlockSpec((tm, tk), lambda i, j, k: (i, k)),
                pl.BlockSpec((tk, tn), lambda i, j, k: (k, j)),
                pl.BlockSpec((1, tn), lambda i, j, k: (0, j)),
            ],
            out_specs=pl.BlockSpec((tm, tn), lambda i, j, k: (i, j)),
            scratch_shapes=[pltpu.VMEM((tm, tn), jnp.float32)],
        ),
        compiler_params=pltpu.CompilerParams(
            dimension_semantics=("parallel", "parallel", "arbitrary"),
        ),
        cost_estimate=cost,
    )(x2, w2, b2)


# ----------------------------------------------------------------------------------
# Public wrapper (matches Conv1D_Sim.forward semantics: y = x @ w + b).
# ----------------------------------------------------------------------------------
def conv1d_sim(x, w, b, *, compute_dtype=jnp.bfloat16, w_budget_bytes=None):
    """GPT-2 style Conv1D: y = x @ w + b. x: [..., nx], w: [nx, nf], b: [nf].

    compute_dtype controls MXU operand precision (accumulation is always f32).
    bf16 (default) is the TPU-native fast path; pass jnp.float32 for exact f32
    operand precision at reduced MXU throughput.
    """
    nx, nf = w.shape
    assert x.shape[-1] == nx, "feature dim of x must match w's first dim"
    lead = x.shape[:-1]
    m = 1
    for d in lead:
        m *= d
    out_dtype = x.dtype

    # K padding only (mandatory when the reduction dim is not 128-aligned; a no-op for
    # GPT-2 widths). No M padding, no wrapper-side astype pass over the activation.
    k_pad = _round_up(nx, 128)
    x2 = x.reshape(m, nx)
    if k_pad != nx:
        x2 = jnp.pad(x2, ((0, 0), (0, k_pad - nx)))
    w2 = w.astype(compute_dtype)  # weight is small; one wrapper pass is fine
    if k_pad != nx:
        w2 = jnp.pad(w2, ((0, k_pad - nx), (0, 0)))
    b2 = b.astype(jnp.float32).reshape(1, nf)

    vmem_cap = _vmem_capacity_bytes()
    if w_budget_bytes is None:
        # Cap the resident weight slab so it fits comfortably on all of v5e/v6e/v7x.
        w_budget_bytes = min(vmem_cap // 4, 24 * _MIB)

    out = _conv1d_fullk(x2, w2, b2, out_dtype, w_budget=w_budget_bytes, vmem_cap=vmem_cap)
    if out is None:
        out = _conv1d_ktiled(x2.astype(compute_dtype), w2, b2, out_dtype)

    if out.shape[1] != nf:
        out = out[:, :nf]
    return out.reshape(*lead, nf)


if __name__ == "__main__":
    # TODO(synk): the hw_sim SRAM load/read bookkeeping (sram_load/sram_read, overflow
    # handling) of the PyTorch module has no Pallas equivalent; parameters are plain
    # JAX arrays here and only the forward math y = x @ w + b is implemented.

    # ---- test 1: shapes implied by the module (hidden nx=32, projection nf=64) ----
    batch, seq, nx, nf = 2, 8, 32, 64
    key = jax.random.PRNGKey(0)
    kx, kw = jax.random.split(key)

    x = jax.random.normal(kx, (batch, seq, nx), dtype=jnp.float32)
    # Mirrors torch.randn(nx, nf) * 0.02 and torch.zeros(nf).
    w = jax.random.normal(kw, (nx, nf), dtype=jnp.float32) * 0.02
    b = jnp.zeros((nf,), dtype=jnp.float32)

    y = jax.block_until_ready(conv1d_sim(x, w, b))
    assert y.shape == (batch, seq, nf)

    y_ref_bf16 = (
        jnp.dot(x.reshape(-1, nx).astype(jnp.bfloat16), w.astype(jnp.bfloat16),
                preferred_element_type=jnp.float32) + b
    ).reshape(batch, seq, nf)
    assert jnp.allclose(y, y_ref_bf16, atol=1e-3, rtol=1e-3)
    assert jnp.allclose(y, x @ w + b, atol=2e-2, rtol=2e-2)

    # ---- test 2: ragged / multi-tile shapes (multiple M blocks, N padding, in-kernel cast) ----
    b2_, s2_, nx2, nf2 = 2, 160, 320, 400
    kx2, kw2 = jax.random.split(jax.random.PRNGKey(1))
    x_big = jax.random.normal(kx2, (b2_, s2_, nx2), dtype=jnp.float32)
    w_big = jax.random.normal(kw2, (nx2, nf2), dtype=jnp.float32) * 0.02
    bias_big = jax.random.normal(jax.random.PRNGKey(2), (nf2,), dtype=jnp.float32) * 0.02

    y_big = jax.block_until_ready(conv1d_sim(x_big, w_big, bias_big))
    y_big_ref = (
        jnp.dot(x_big.reshape(-1, nx2).astype(jnp.bfloat16), w_big.astype(jnp.bfloat16),
                preferred_element_type=jnp.float32) + bias_big
    ).reshape(b2_, s2_, nf2)
    assert y_big.shape == (b2_, s2_, nf2)
    assert jnp.allclose(y_big, y_big_ref, atol=2e-3, rtol=2e-3)

    # ---- test 3: exercise the K-tiled fallback path (accumulator + pl.when, 3 K steps) ----
    m3, nx3, nf3 = 96, 320, 256
    x3 = jax.random.normal(jax.random.PRNGKey(3), (m3, nx3), dtype=jnp.float32)
    w3 = jax.random.normal(jax.random.PRNGKey(4), (nx3, nf3), dtype=jnp.float32) * 0.02
    b3 = jax.random.normal(jax.random.PRNGKey(5), (nf3,), dtype=jnp.float32) * 0.02
    y3 = _conv1d_ktiled(x3.astype(jnp.bfloat16), w3.astype(jnp.bfloat16),
                        b3.reshape(1, nf3), jnp.float32, tm=64, tn=128, tk=128)
    y3 = jax.block_until_ready(y3)[:, :nf3]
    y3_ref = jnp.dot(x3.astype(jnp.bfloat16), w3.astype(jnp.bfloat16),
                     preferred_element_type=jnp.float32) + b3
    assert jnp.allclose(y3, y3_ref, atol=2e-3, rtol=2e-3)

    print("KERNEL_OK")
</pallas_src>

<mosaic_0001>
module attributes {stable_mosaic.version = 11 : i64} {
  func.func @_fullk_kernel(%arg0: i32, %arg1: i32, %arg2: memref<16x128xf32, #tpu.memory_space<vmem>>, %arg3: memref<128x128xbf16, #tpu.memory_space<vmem>>, %arg4: memref<1x128xf32, #tpu.memory_space<vmem>>, %arg5: memref<16x128xf32, #tpu.memory_space<vmem>>) attributes {dimension_semantics = [#tpu.dimension_semantics<parallel>, #tpu.dimension_semantics<parallel>], iteration_bounds = array<i64: 1, 1>, scalar_prefetch = 0 : i64, scratch_operands = 0 : i64, tpu.core_type = #tpu.core_type<tc>, window_params = [{transform_indices = @transform_0, window_bounds = array<i64: 16, 128>}, {transform_indices = @transform_1, window_bounds = array<i64: 128, 128>}, {transform_indices = @transform_2, window_bounds = array<i64: 1, 128>}, {transform_indices = @transform_3, window_bounds = array<i64: 16, 128>}]} {
    %c0 = arith.constant 0 : index
    %c0_0 = arith.constant 0 : index
    %0 = vector.load %arg2[%c0, %c0_0] : memref<16x128xf32, #tpu.memory_space<vmem>>, vector<16x128xf32>
    %1 = arith.truncf %0 : vector<16x128xf32> to vector<16x128xbf16>
    %c0_1 = arith.constant 0 : index
    %c0_2 = arith.constant 0 : index
    %2 = vector.load %arg3[%c0_1, %c0_2] : memref<128x128xbf16, #tpu.memory_space<vmem>>, vector<128x128xbf16>
    %cst = arith.constant dense<0.000000e+00> : vector<16x128xf32>
    %3 = tpu.matmul %1, %2, %cst {dimension_numbers = #tpu.dot_dimension_numbers<[1], [0], [0], [1], [0, 0, 1, 1], [], []>} : vector<16x128xbf16>, vector<128x128xbf16>, vector<16x128xf32> -> vector<16x128xf32>
    %c0_3 = arith.constant 0 : index
    %c0_4 = arith.constant 0 : index
    %4 = vector.load %arg4[%c0_3, %c0_4] : memref<1x128xf32, #tpu.memory_space<vmem>>, vector<1x128xf32>
    %5 = vector.broadcast %4 : vector<1x128xf32> to vector<16x128xf32>
    %6 = arith.addf %3, %5 : vector<16x128xf32>
    %c0_5 = arith.constant 0 : index
    %c0_6 = arith.constant 0 : index
    %7 = vector.load %arg5[%c0_5, %c0_6] : memref<16x128xf32, #tpu.memory_space<vmem>>, vector<16x128xf32>
    tpu.vector_store %arg5[%c0_5, %c0_6], %6 {strides = array<i32>} : memref<16x128xf32, #tpu.memory_space<vmem>>, vector<16x128xf32>,
    return
  }
  func.func @transform_0(%arg0: i32, %arg1: i32) -> (i32, i32) {
    %c0_i32 = arith.constant 0 : i32
    %c0_i32_0 = arith.constant 0 : i32
    return %arg1, %c0_i32 : i32, i32
  }
  func.func @transform_1(%arg0: i32, %arg1: i32) -> (i32, i32) {
    %c0_i32 = arith.constant 0 : i32
    %c0_i32_0 = arith.constant 0 : i32
    return %c0_i32, %arg0 : i32, i32
  }
  func.func @transform_2(%arg0: i32, %arg1: i32) -> (i32, i32) {
    %c0_i32 = arith.constant 0 : i32
    %c0_i32_0 = arith.constant 0 : i32
    return %c0_i32, %arg0 : i32, i32
  }
  func.func @transform_3(%arg0: i32, %arg1: i32) -> (i32, i32) {
    %c0_i32 = arith.constant 0 : i32
    return %arg1, %arg0 : i32, i32
  }
}

</mosaic_0001>

<llo_original>
// kernel: tpu_custom_call.1
$region0: #{tpu_custom_call.1}
  #allocation0 [shape = 'u32[]', space=smem, size = 0x4, offset = 0x4, fixed_abs, tag = 'smem constant byte address 0x4 - core index']
  #allocation1 [shape = 'u32[144,128]{1,0:T(1,128)}', space=vmem, size = 0x12000, scoped, tag = 'internal scratch']
  %s0 = inlined_call_operand.hbm [shape: f32[16,128], index: 0, kind: input, shape index: {}]
  %s1 = inlined_call_operand.hbm [shape: bf16[128,128], index: 1, kind: input, shape index: {}]
  %s2 = inlined_call_operand.vmem [shape: f32[1,128], index: 2, kind: input, shape index: {}]
  %s3 = inlined_call_operand.hbm [shape: f32[16,128], index: 3, kind: output, shape index: {}]
  %s4 = sld [smem:[#allocation0]]
  $region30: #{tpu_custom_call.1} parent=0
    _
  %s6 = ssub.s32 1, %s4
  %s7 = scalar_select 0, %s6, %s4
  $region1: #{tpu_custom_call.1} parent=0
    #allocation2 [shape = 'u8[8192]{0}', space=vmem, size = 0x2000, scoped, tag = 'input window, operand 0, single buffered']
    #allocation3 [shape = 's32[1]{0}', space=sflag, size = 0x4, scoped, tag = 'scoped memory for tpu_custom_call.1']
    #allocation4 [shape = 's32[1]{0}', space=sflag, size = 0x4, scoped, tag = 'scoped memory for tpu_custom_call.1']
    #allocation5 [shape = 'u8[32768]{0}', space=vmem, size = 0x8000, scoped, tag = 'input window, operand 1, single buffered']
    #allocation6 [shape = 's32[1]{0}', space=sflag, size = 0x4, scoped, tag = 'scoped memory for tpu_custom_call.1']
    #allocation7 [shape = 'u8[8192]{0}', space=vmem, size = 0x2000, scoped, tag = 'output window, operand 0, single buffered']
    %8 = vsyncpa [#allocation3], 0
    %9 = vsyncpa [#allocation6], 0
    %10 = vsyncpa [#allocation4], 0
    // Predicated region
    $region2: #{tpu_custom_call.1} parent=1 // pred_check
      _
    $region3: #{tpu_custom_call.1} parent=1 // pred_check_branch
      %12 = sbr.rel (0) target = $region5
    $region4: #{tpu_custom_call.1} parent=1 // pred_region
      %s14 = ssub.s32 256, 256
      %15 = vsyncadd [#allocation3], %s14
      %s16 = sshll.u32 [#allocation2], 4
      %s17 = int_to_ptr.vmem [resolvable:$true] %s16
      %22 = dma.hbm_to_vmem [thread:$0]  %s0, 256, %s17, [#allocation3], 128, 128, 8
    $region5: #{tpu_custom_call.1} parent=1 // pred_fallthru
      _
    // Predicated region
    $region6: #{tpu_custom_call.1} parent=1 // pred_check
      _
    $region7: #{tpu_custom_call.1} parent=1 // pred_check_branch
      %24 = sbr.rel (0) target = $region9
    $region8: #{tpu_custom_call.1} parent=1 // pred_region
      %s26 = ssub.s32 1024, 1024
      %27 = vsyncadd [#allocation6], %s26
      %s28 = sshll.u32 [#allocation5], 4
      %s29 = int_to_ptr.vmem [resolvable:$true] %s28
      %34 = dma.hbm_to_vmem [thread:$0]  %s1, 1024, %s29, [#allocation6], 64, 64, 4
    $region9: #{tpu_custom_call.1} parent=1 // pred_fallthru
      _
    // Predicated region
    $region10: #{tpu_custom_call.1} parent=1 // pred_check
      _
    $region11: #{tpu_custom_call.1} parent=1 // pred_check_branch
      %36 = sbr.rel (0) target = $region13
    $region12: #{tpu_custom_call.1} parent=1 // pred_region
      _
    $region13: #{tpu_custom_call.1} parent=1 // pred_fallthru
      _
    // Predicated region
    $region14: #{tpu_custom_call.1} parent=1 // pred_check
      _
    $region15: #{tpu_custom_call.1} parent=1 // pred_check_branch
      %38 = sbr.rel (0) target = $region17
    $region16: #{tpu_custom_call.1} parent=1 // pred_region
      %39 = dma.done [#allocation3], 256
    $region17: #{tpu_custom_call.1} parent=1 // pred_fallthru
      _
    // Predicated region
    $region18: #{tpu_custom_call.1} parent=1 // pred_check
      _
    $region19: #{tpu_custom_call.1} parent=1 // pred_check_branch
      %41 = sbr.rel (0) target = $region21
    $region20: #{tpu_custom_call.1} parent=1 // pred_region
      %42 = dma.done [#allocation6], 1024
    $region21: #{tpu_custom_call.1} parent=1 // pred_fallthru
      _
    %v44 = vld [vmem:[#allocation2] sm:$0xff]
    %v45 = vld [vmem:[#allocation2 + $0x8] sm:$0xff]
    %v46 = vpack.c.bf16 %v45, %v44
    %v47 = vld [vmem:[#allocation5] sm:$0xf]
    %v48 = vld [vmem:[#allocation5 + $0x4] sm:$0xf]
    %v49 = vld [vmem:[#allocation5 + $0x8] sm:$0xf]
    %v50 = vld [vmem:[#allocation5 + $0xc] sm:$0xf]
    %v51 = vld [vmem:[#allocation5 + $0x10] sm:$0xf]
    %v52 = vld [vmem:[#allocation5 + $0x14] sm:$0xf]
    %v53 = vld [vmem:[#allocation5 + $0x18] sm:$0xf]
    %v54 = vld [vmem:[#allocation5 + $0x1c] sm:$0xf]
    %v55 = vld [vmem:[#allocation5 + $0x20] sm:$0xf]
    %v56 = vld [vmem:[#allocation5 + $0x24] sm:$0xf]
    %v57 = vld [vmem:[#allocation5 + $0x28] sm:$0xf]
    %v58 = vld [vmem:[#allocation5 + $0x2c] sm:$0xf]
    %v59 = vld [vmem:[#allocation5 + $0x30] sm:$0xf]
    %v60 = vld [vmem:[#allocation5 + $0x34] sm:$0xf]
    %v61 = vld [vmem:[#allocation5 + $0x38] sm:$0xf]
    %v62 = vld [vmem:[#allocation5 + $0x3c] sm:$0xf]
    %v63 = vld [vmem:[%s2] sm:$0x1]
    %v65 = vlaneseq
    %v66 = vshrl.u32 %v65, 7
    %v67 = vsub.s32 0, %v66
    %v68 = vrot.slane %v63, %v67
    %v86 = vunpack.c.l.b16 %v47
    %v87 = vunpack.c.l.b16 %v48
    %v88 = vunpack.c.l.b16 %v49
    %v89 = vunpack.c.l.b16 %v50
    %v90 = vunpack.c.l.b16 %v51
    %v91 = vunpack.c.l.b16 %v52
    %v92 = vunpack.c.l.b16 %v53
    %v93 = vunpack.c.l.b16 %v54
    %v94 = vunpack.c.l.b16 %v55
    %v95 = vunpack.c.l.b16 %v56
    %v96 = vunpack.c.l.b16 %v57
    %v97 = vunpack.c.l.b16 %v58
    %v98 = vunpack.c.l.b16 %v59
    %v99 = vunpack.c.l.b16 %v60
    %v100 = vunpack.c.l.b16 %v61
    %v101 = vunpack.c.l.b16 %v62
    %v102 = vpack.c.b16 %v87, %v86
    %v103 = vpack.c.b16 %v89, %v88
    %v104 = vpack.c.b16 %v91, %v90
    %v105 = vpack.c.b16 %v93, %v92
    %v106 = vpack.c.b16 %v95, %v94
    %v107 = vpack.c.b16 %v97, %v96
    %v108 = vpack.c.b16 %v99, %v98
    %v109 = vpack.c.b16 %v101, %v100
    %118 = vmatprep.subr.bf16.mxu0 0
    %119 = vmatpush1.bf16.msra.mxu0 %v102
    %120 = vmatprep.subr.bf16.mxu0 0
    %121 = vmatpush1.bf16.msra.mxu0 %v103
    %122 = vmatprep.subr.bf16.mxu0 0
    %123 = vmatpush1.bf16.msra.mxu0 %v104
    %124 = vmatprep.subr.bf16.mxu0 0
    %125 = vmatpush1.bf16.msra.mxu0 %v105
    %126 = vmatprep.subr.bf16.mxu0 0
    %127 = vmatpush1.bf16.msra.mxu0 %v106
    %128 = vmatprep.subr.bf16.mxu0 0
    %129 = vmatpush1.bf16.msra.mxu0 %v107
    %130 = vmatprep.subr.bf16.mxu0 0
    %131 = vmatpush1.bf16.msra.mxu0 %v108
    %132 = vmatprep.subr.bf16.mxu0 0
    %133 = vmatpush1.bf16.msra.mxu0 %v109
    %134 = vmatprep.subr.bf16.mxu0 0
    %135 = vmatpush1.bf16.msra.mxu0 0
    %136 = vmatprep.subr.bf16.mxu0 0
    %137 = vmatpush1.bf16.msra.mxu0 0
    %138 = vmatprep.subr.bf16.mxu0 0
    %139 = vmatpush1.bf16.msra.mxu0 0
    %140 = vmatprep.subr.bf16.mxu0 0
    %141 = vmatpush1.bf16.msra.mxu0 0
    %142 = vmatprep.subr.bf16.mxu0 0
    %143 = vmatpush1.bf16.msra.mxu0 0
    %144 = vmatprep.subr.bf16.mxu0 0
    %145 = vmatpush1.bf16.msra.mxu0 0
    %146 = vmatprep.subr.bf16.mxu0 0
    %147 = vmatpush1.bf16.msra.mxu0 0
    %148 = vmatprep.subr.bf16.mxu0 0
    %149 = vmatpush1.bf16.msra.mxu0 0
    %150 = vmatprep.mubr.bf16.mxu0 0
    %151 = vmatmul.mubr.bf16.gmra.mrb[0].mxu0 %v46
    %v152 = vpop.f32.mrb[0].mxu0
    %v153 = vadd.f32 %v68, %v152
    %v154 = vpop.f32.mrb[0].mxu0
    %v155 = vpop.f32.mrb[0].mxu0
    %v156 = vadd.f32 %v68, %v155
    %v157 = vpop.f32.mrb[0].mxu0
    %158 = vdwg.mxu0
    %159 = vst [vmem:[#allocation7] sm:$0xff] %v153
    %160 = vst [vmem:[#allocation7 + $0x8] sm:$0xff] %v156
    // Predicated region
    $region22: #{tpu_custom_call.1} parent=1 // pred_check
      _
    $region23: #{tpu_custom_call.1} parent=1 // pred_check_branch
      %162 = sbr.rel (0) target = $region25
    $region24: #{tpu_custom_call.1} parent=1 // pred_region
      %s164 = ssub.s32 256, 256
      %165 = vsyncadd [#allocation4], %s164
      %s166 = sshll.u32 [#allocation7], 4
      %s167 = int_to_ptr.vmem [resolvable:$true] %s166
      %172 = dma.vmem_to_hbm [thread:$0]  %s167, 256, %s3, [#allocation4], 128, 128, 8
    $region25: #{tpu_custom_call.1} parent=1 // pred_fallthru
      _
    // Predicated region
    $region26: #{tpu_custom_call.1} parent=1 // pred_check
      _
    $region27: #{tpu_custom_call.1} parent=1 // pred_check_branch
      %174 = sbr.rel (0) target = $region29
    $region28: #{tpu_custom_call.1} parent=1 // pred_region
      %175 = dma.done [#allocation4], 256
    $region29: #{tpu_custom_call.1} parent=1 // pred_fallthru
      _
    %176 = vsyncpa [#allocation3], 1
    %177 = vsyncpa [#allocation6], 1
    %178 = vsyncpa [#allocation4], 1

</llo_original>
